<compile_context>
chip_gen: v7x
topology: tpu7x:2x2x1
jax: 0.10.0
libtpu: 0.0.40
codegen_flags: <defaults>
</compile_context>

<pallas_src>
import math
import jax
import jax.numpy as jnp
from jax.experimental import pallas as pl
from jax.experimental.pallas import tpu as pltpu


def _cross_attn_kernel(x_ref, ce_ref, lnw_ref, lnb_ref,
                       wv_ref, bv_ref, wp_ref, bp_ref, o_ref):
    eps = 1e-5

    # ---- LayerNorm(c_ch) on the class embedding, in COLUMN layout (c_ch, 1)
    # so the resulting per-channel vector lands on the sublane axis and
    # broadcasts directly against the (C, tHW) NCHW tile (no transpose).
    ce = ce_ref[0]                                             # (c_ch, 1)
    mu = jnp.mean(ce, axis=0, keepdims=True)                   # (1, 1)
    var = jnp.mean((ce - mu) ** 2, axis=0, keepdims=True)
    ce_n = (ce - mu) * jax.lax.rsqrt(var + eps)
    ce_n = ce_n * lnw_ref[...] + lnb_ref[...]                  # (c_ch, 1)

    # ---- v = proj_v(LN(ce));  row = proj(v)  (tiny matrix-vector products;
    # recomputed per spatial tile, cost is negligible vs. the tile DMA).
    v = jnp.dot(wv_ref[...], ce_n,
                preferred_element_type=jnp.float32) + bv_ref[...]     # (C, 1)
    row = jnp.dot(wp_ref[...], v,
                  preferred_element_type=jnp.float32) + bp_ref[...]   # (C, 1)

    # ---- softmax over the length-1 key axis == 1.0 exactly, so the attention
    # output is just `row` broadcast over the spatial (lane) axis; residual add.
    o_ref[0] = (x_ref[0] + row).astype(o_ref.dtype)            # (C, tHW)


def _pick_spatial_tile(hw, c, max_block_bytes=2 * 1024 * 1024):
    """Largest lane tile that divides HW, is a multiple of 128, and keeps one
    (C, tHW) f32 block under ~2 MiB, so x/out double-buffers + weights stay
    comfortably within scoped VMEM on v5e (16 MiB default), v6e (32 MiB) and
    v7x (32 MiB of 64 MiB physical)."""
    if hw % 128 != 0:
        return hw                      # small / ragged spatial extent: whole thing
    cap = max(128, (max_block_bytes // (4 * c)) // 128 * 128)
    t = min(hw, cap)
    while hw % t:
        t -= 128
    return t


def cross_attn_block(x, class_emb, params):
    B, C, H, W = x.shape
    c_ch = class_emb.shape[-1]
    HW = H * W

    # Native NCHW: (B, C, H, W) -> (B, C, HW) is a free, contiguous reshape.
    x_flat = x.reshape(B, C, HW)
    ce_col = class_emb.reshape(B, c_ch, 1)

    t_hw = _pick_spatial_tile(HW, C)
    n_s = HW // t_hw

    # Only the live parameters (proj_v, proj, class LayerNorm) are fed to the
    # kernel; GroupNorm / proj_q / proj_k are mathematically inert (size-1
    # softmax) and intentionally dropped.  Biases / LN params are columns so
    # everything stays in the channel-on-sublane layout.
    param_args = (
        params["ln_w"].reshape(c_ch, 1), params["ln_b"].reshape(c_ch, 1),
        params["wv"],                    params["bv"].reshape(C, 1),
        params["wp"],                    params["bp"].reshape(C, 1),
    )

    in_specs = [
        pl.BlockSpec((1, C, t_hw), lambda b, s: (b, 0, s)),     # x tile
        pl.BlockSpec((1, c_ch, 1), lambda b, s: (b, 0, 0)),     # class emb
    ] + [pl.BlockSpec(a.shape, lambda b, s: (0, 0)) for a in param_args]

    out = pl.pallas_call(
        _cross_attn_kernel,
        out_shape=jax.ShapeDtypeStruct((B, C, HW), x.dtype),
        grid_spec=pltpu.PrefetchScalarGridSpec(
            num_scalar_prefetch=0,
            grid=(B, n_s),
            in_specs=in_specs,
            out_specs=pl.BlockSpec((1, C, t_hw), lambda b, s: (b, 0, s)),
        ),
        compiler_params=pltpu.CompilerParams(
            dimension_semantics=("parallel", "parallel"),
            vmem_limit_bytes=32 * 1024 * 1024,
        ),
    )(x_flat, ce_col, *param_args)

    return out.reshape(B, C, H, W)


def init_params(key, in_ch, c_ch):
    def xavier(k, shape, fan_in, fan_out):
        bound = math.sqrt(6.0 / (fan_in + fan_out))
        return jax.random.uniform(k, shape, jnp.float32, -bound, bound)

    k0, k1, k2, k3 = jax.random.split(key, 4)
    return {
        "gn_w": jnp.ones((in_ch,), jnp.float32),
        "gn_b": jnp.zeros((in_ch,), jnp.float32),
        "ln_w": jnp.ones((c_ch,), jnp.float32),
        "ln_b": jnp.zeros((c_ch,), jnp.float32),
        # conv 1x1 weight (out, in), xavier_uniform, zero bias
        "wq": xavier(k0, (in_ch, in_ch), in_ch, in_ch),
        "bq": jnp.zeros((in_ch,), jnp.float32),
        # Linear weight (out, in), xavier_uniform, zero bias
        "wk": xavier(k1, (in_ch, c_ch), c_ch, in_ch),
        "bk": jnp.zeros((in_ch,), jnp.float32),
        "wv": xavier(k2, (in_ch, c_ch), c_ch, in_ch),
        "bv": jnp.zeros((in_ch,), jnp.float32),
        "wp": xavier(k3, (in_ch, in_ch), in_ch, in_ch),
        "bp": jnp.zeros((in_ch,), jnp.float32),
    }


def ref_forward(x, ce, p):
    """Pure-JAX reference matching the PyTorch forward op-for-op (including the
    GroupNorm / q / k / softmax path) — used to verify the simplified kernel is
    numerically identical."""
    B, C, H, W = x.shape
    G, gs = 32, C // 32
    eps = 1e-5
    xr = x.reshape(B, G, gs * H * W)
    mean = xr.mean(-1, keepdims=True)
    var = ((xr - mean) ** 2).mean(-1, keepdims=True)
    h = ((xr - mean) / jnp.sqrt(var + eps)).reshape(B, C, H, W)
    h = h * p["gn_w"][None, :, None, None] + p["gn_b"][None, :, None, None]

    mu = ce.mean(-1, keepdims=True)
    cv = ((ce - mu) ** 2).mean(-1, keepdims=True)
    cen = (ce - mu) / jnp.sqrt(cv + eps) * p["ln_w"] + p["ln_b"]

    hl = jnp.transpose(h, (0, 2, 3, 1)).reshape(B, H * W, C)
    q = hl @ p["wq"].T + p["bq"]
    k = cen @ p["wk"].T + p["bk"]
    v = cen @ p["wv"].T + p["bv"]
    w = jnp.einsum("bnc,bc->bn", q, k)[..., None] * (C ** -0.5)
    w = jax.nn.softmax(w, axis=-1)
    hh = w * v[:, None, :]
    out = hh @ p["wp"].T + p["bp"]
    out = jnp.transpose(out.reshape(B, H, W, C), (0, 3, 1, 2))
    return x + out


if __name__ == "__main__":
    key = jax.random.PRNGKey(0)
    B, C, H, W, c_ch = 2, 64, 8, 8, 32   # in_ch must be a multiple of 32 (GroupNorm(32, .))
    kx, kc, kp = jax.random.split(key, 3)
    x = jax.random.normal(kx, (B, C, H, W), jnp.float32)
    class_emb = jax.random.normal(kc, (B, c_ch), jnp.float32)
    params = init_params(kp, C, c_ch)

    out = jax.block_until_ready(cross_attn_block(x, class_emb, params))
    ref = ref_forward(x, class_emb, params)
    max_err = float(jnp.max(jnp.abs(out - ref)))
    assert out.shape == x.shape and out.dtype == x.dtype
    assert max_err < 1e-4, f"mismatch vs reference, max abs err = {max_err}"
    print("KERNEL_OK")
</pallas_src>

<mosaic_0001>
module attributes {stable_mosaic.version = 11 : i64} {
  func.func @_cross_attn_kernel(%arg0: i32, %arg1: i32, %arg2: memref<1x64x64xf32, #tpu.memory_space<vmem>>, %arg3: memref<1x32x1xf32, #tpu.memory_space<vmem>>, %arg4: memref<32x1xf32, #tpu.memory_space<vmem>>, %arg5: memref<32x1xf32, #tpu.memory_space<vmem>>, %arg6: memref<64x32xf32, #tpu.memory_space<vmem>>, %arg7: memref<64x1xf32, #tpu.memory_space<vmem>>, %arg8: memref<64x64xf32, #tpu.memory_space<vmem>>, %arg9: memref<64x1xf32, #tpu.memory_space<vmem>>, %arg10: memref<1x64x64xf32, #tpu.memory_space<vmem>>) attributes {dimension_semantics = [#tpu.dimension_semantics<parallel>, #tpu.dimension_semantics<parallel>], iteration_bounds = array<i64: 2, 1>, scalar_prefetch = 0 : i64, scratch_operands = 0 : i64, tpu.core_type = #tpu.core_type<tc>, window_params = [{transform_indices = @transform_0, window_bounds = array<i64: 1, 64, 64>}, {transform_indices = @transform_1, window_bounds = array<i64: 1, 32, 1>}, {pipeline_mode = #tpu.pipeline_mode<synchronous>, transform_indices = @transform_2, window_bounds = array<i64: 32, 1>}, {pipeline_mode = #tpu.pipeline_mode<synchronous>, transform_indices = @transform_3, window_bounds = array<i64: 32, 1>}, {pipeline_mode = #tpu.pipeline_mode<synchronous>, transform_indices = @transform_4, window_bounds = array<i64: 64, 32>}, {pipeline_mode = #tpu.pipeline_mode<synchronous>, transform_indices = @transform_5, window_bounds = array<i64: 64, 1>}, {pipeline_mode = #tpu.pipeline_mode<synchronous>, transform_indices = @transform_6, window_bounds = array<i64: 64, 64>}, {pipeline_mode = #tpu.pipeline_mode<synchronous>, transform_indices = @transform_7, window_bounds = array<i64: 64, 1>}, {transform_indices = @transform_8, window_bounds = array<i64: 1, 64, 64>}]} {
    %c0 = arith.constant 0 : index
    %c0_0 = arith.constant 0 : index
    %c0_1 = arith.constant 0 : index
    %0 = vector.load %arg3[%c0, %c0_0, %c0_1] : memref<1x32x1xf32, #tpu.memory_space<vmem>>, vector<1x32x1xf32>
    %1 = vector.shape_cast %0 : vector<1x32x1xf32> to vector<32x1xf32>
    %cst = arith.constant dense<0.000000e+00> : vector<1xf32>
    %2 = vector.multi_reduction <add>, %1, %cst [0] : vector<32x1xf32> to vector<1xf32>
    %3 = vector.shape_cast %2 : vector<1xf32> to vector<1x1xf32>
    %cst_2 = arith.constant 3.200000e+01 : f32
    %4 = vector.broadcast %cst_2 : f32 to vector<1x1xf32>
    %5 = arith.divf %3, %4 : vector<1x1xf32>
    %6 = vector.broadcast %5 : vector<1x1xf32> to vector<32x1xf32>
    %7 = arith.subf %1, %6 : vector<32x1xf32>
    %8 = arith.mulf %7, %7 : vector<32x1xf32>
    %cst_3 = arith.constant dense<0.000000e+00> : vector<1xf32>
    %9 = vector.multi_reduction <add>, %8, %cst_3 [0] : vector<32x1xf32> to vector<1xf32>
    %10 = vector.shape_cast %9 : vector<1xf32> to vector<1x1xf32>
    %cst_4 = arith.constant 3.200000e+01 : f32
    %11 = vector.broadcast %cst_4 : f32 to vector<1x1xf32>
    %12 = arith.divf %10, %11 : vector<1x1xf32>
    %13 = vector.broadcast %5 : vector<1x1xf32> to vector<32x1xf32>
    %14 = arith.subf %1, %13 : vector<32x1xf32>
    %cst_5 = arith.constant 9.99999974E-6 : f32
    %15 = vector.broadcast %cst_5 : f32 to vector<1x1xf32>
    %16 = arith.addf %12, %15 : vector<1x1xf32>
    %17 = math.rsqrt %16 : vector<1x1xf32>
    %18 = vector.broadcast %17 : vector<1x1xf32> to vector<32x1xf32>
    %19 = arith.mulf %14, %18 : vector<32x1xf32>
    %c0_6 = arith.constant 0 : index
    %c0_7 = arith.constant 0 : index
    %20 = vector.load %arg4[%c0_6, %c0_7] : memref<32x1xf32, #tpu.memory_space<vmem>>, vector<32x1xf32>
    %21 = arith.mulf %19, %20 : vector<32x1xf32>
    %c0_8 = arith.constant 0 : index
    %c0_9 = arith.constant 0 : index
    %22 = vector.load %arg5[%c0_8, %c0_9] : memref<32x1xf32, #tpu.memory_space<vmem>>, vector<32x1xf32>
    %23 = arith.addf %21, %22 : vector<32x1xf32>
    %c0_10 = arith.constant 0 : index
    %c0_11 = arith.constant 0 : index
    %24 = vector.load %arg6[%c0_10, %c0_11] : memref<64x32xf32, #tpu.memory_space<vmem>>, vector<64x32xf32>
    %cst_12 = arith.constant dense<0.000000e+00> : vector<64x1xf32>
    %25 = tpu.matmul %24, %23, %cst_12 {dimension_numbers = #tpu.dot_dimension_numbers<[1], [0], [0], [1], [0, 0, 1, 1], [], []>} : vector<64x32xf32>, vector<32x1xf32>, vector<64x1xf32> -> vector<64x1xf32>
    %c0_13 = arith.constant 0 : index
    %c0_14 = arith.constant 0 : index
    %26 = vector.load %arg7[%c0_13, %c0_14] : memref<64x1xf32, #tpu.memory_space<vmem>>, vector<64x1xf32>
    %27 = arith.addf %25, %26 : vector<64x1xf32>
    %c0_15 = arith.constant 0 : index
    %c0_16 = arith.constant 0 : index
    %28 = vector.load %arg8[%c0_15, %c0_16] : memref<64x64xf32, #tpu.memory_space<vmem>>, vector<64x64xf32>
    %cst_17 = arith.constant dense<0.000000e+00> : vector<64x1xf32>
    %29 = tpu.matmul %28, %27, %cst_17 {dimension_numbers = #tpu.dot_dimension_numbers<[1], [0], [0], [1], [0, 0, 1, 1], [], []>} : vector<64x64xf32>, vector<64x1xf32>, vector<64x1xf32> -> vector<64x1xf32>
    %c0_18 = arith.constant 0 : index
    %c0_19 = arith.constant 0 : index
    %30 = vector.load %arg9[%c0_18, %c0_19] : memref<64x1xf32, #tpu.memory_space<vmem>>, vector<64x1xf32>
    %31 = arith.addf %29, %30 : vector<64x1xf32>
    %c0_20 = arith.constant 0 : index
    %c0_21 = arith.constant 0 : index
    %c0_22 = arith.constant 0 : index
    %32 = vector.load %arg2[%c0_20, %c0_21, %c0_22] : memref<1x64x64xf32, #tpu.memory_space<vmem>>, vector<1x64x64xf32>
    %33 = vector.shape_cast %32 : vector<1x64x64xf32> to vector<64x64xf32>
    %34 = vector.broadcast %31 : vector<64x1xf32> to vector<64x64xf32>
    %35 = arith.addf %33, %34 : vector<64x64xf32>
    %c0_23 = arith.constant 0 : index
    %c0_24 = arith.constant 0 : index
    %c0_25 = arith.constant 0 : index
    %36 = vector.load %arg10[%c0_23, %c0_24, %c0_25] : memref<1x64x64xf32, #tpu.memory_space<vmem>>, vector<1x64x64xf32>
    %37 = vector.shape_cast %36 : vector<1x64x64xf32> to vector<64x64xf32>
    %38 = vector.shape_cast %35 : vector<64x64xf32> to vector<1x64x64xf32>
    tpu.vector_store %arg10[%c0_23, %c0_24, %c0_25], %38 {strides = array<i32>} : memref<1x64x64xf32, #tpu.memory_space<vmem>>, vector<1x64x64xf32>,
    return
  }
  func.func @transform_0(%arg0: i32, %arg1: i32) -> (i32, i32, i32) {
    %c0_i32 = arith.constant 0 : i32
    %c0_i32_0 = arith.constant 0 : i32
    return %arg0, %c0_i32, %arg1 : i32, i32, i32
  }
  func.func @transform_1(%arg0: i32, %arg1: i32) -> (i32, i32, i32) {
    %c0_i32 = arith.constant 0 : i32
    %c0_i32_0 = arith.constant 0 : i32
    %c0_i32_1 = arith.constant 0 : i32
    return %arg0, %c0_i32, %c0_i32_0 : i32, i32, i32
  }
  func.func @transform_2(%arg0: i32, %arg1: i32) -> (i32, i32) {
    %c0_i32 = arith.constant 0 : i32
    %c0_i32_0 = arith.constant 0 : i32
    %c0_i32_1 = arith.constant 0 : i32
    return %c0_i32, %c0_i32_0 : i32, i32
  }
  func.func @transform_3(%arg0: i32, %arg1: i32) -> (i32, i32) {
    %c0_i32 = arith.constant 0 : i32
    %c0_i32_0 = arith.constant 0 : i32
    %c0_i32_1 = arith.constant 0 : i32
    return %c0_i32, %c0_i32_0 : i32, i32
  }
  func.func @transform_4(%arg0: i32, %arg1: i32) -> (i32, i32) {
    %c0_i32 = arith.constant 0 : i32
    %c0_i32_0 = arith.constant 0 : i32
    %c0_i32_1 = arith.constant 0 : i32
    return %c0_i32, %c0_i32_0 : i32, i32
  }
  func.func @transform_5(%arg0: i32, %arg1: i32) -> (i32, i32) {
    %c0_i32 = arith.constant 0 : i32
    %c0_i32_0 = arith.constant 0 : i32
    %c0_i32_1 = arith.constant 0 : i32
    return %c0_i32, %c0_i32_0 : i32, i32
  }
  func.func @transform_6(%arg0: i32, %arg1: i32) -> (i32, i32) {
    %c0_i32 = arith.constant 0 : i32
    %c0_i32_0 = arith.constant 0 : i32
    %c0_i32_1 = arith.constant 0 : i32
    return %c0_i32, %c0_i32_0 : i32, i32
  }
  func.func @transform_7(%arg0: i32, %arg1: i32) -> (i32, i32) {
    %c0_i32 = arith.constant 0 : i32
    %c0_i32_0 = arith.constant 0 : i32
    %c0_i32_1 = arith.constant 0 : i32
    return %c0_i32, %c0_i32_0 : i32, i32
  }
  func.func @transform_8(%arg0: i32, %arg1: i32) -> (i32, i32, i32) {
    %c0_i32 = arith.constant 0 : i32
    %c0_i32_0 = arith.constant 0 : i32
    return %arg0, %c0_i32, %arg1 : i32, i32, i32
  }
}

</mosaic_0001>

<llo_original>
// kernel: tpu_custom_call.1
$region0: #{tpu_custom_call.1}
  #allocation0 [shape = 'u32[]', space=smem, size = 0x4, offset = 0x4, fixed_abs, tag = 'smem constant byte address 0x4 - core index']
  #allocation1 [shape = 'u32[144,128]{1,0:T(1,128)}', space=vmem, size = 0x12000, scoped, tag = 'internal scratch']
  %s0 = inlined_call_operand.vmem [shape: f32[2,64,64], index: 0, kind: input, shape index: {}]
  %s1 = inlined_call_operand.vmem [shape: f32[2,32,1], index: 1, kind: input, shape index: {}]
  %s2 = inlined_call_operand.vmem [shape: f32[32,1], index: 2, kind: input, shape index: {}]
  %s3 = inlined_call_operand.vmem [shape: f32[32,1], index: 3, kind: input, shape index: {}]
  %s4 = inlined_call_operand.vmem [shape: f32[64,32], index: 4, kind: input, shape index: {}]
  %s5 = inlined_call_operand.vmem [shape: f32[64,1], index: 5, kind: input, shape index: {}]
  %s6 = inlined_call_operand.vmem [shape: f32[64,64], index: 6, kind: input, shape index: {}]
  %s7 = inlined_call_operand.vmem [shape: f32[64,1], index: 7, kind: input, shape index: {}]
  %s8 = inlined_call_operand.hbm [shape: f32[2,64,64], index: 8, kind: output, shape index: {}]
  %s9 = sld [smem:[#allocation0]]
  $region65: #{tpu_custom_call.1} parent=0
    _
  %s11 = ssub.s32 1, %s9
  %s12 = scalar_select 0, %s11, %s9
  $region1: #{tpu_custom_call.1} parent=0
    #allocation2 [shape = 'u8[65536]{0}', space=vmem, size = 0x10000, scoped, tag = 'output window, operand 0']
    #allocation3 [shape = 's32[2]{0}', space=sflag, size = 0x8, scoped, tag = 'scoped memory for tpu_custom_call.1']
    %13 = vsyncpa [#allocation3], 0
    %s14 = scalar_lea.sflag [#allocation3], 1
    %15 = vsyncpa %s14, 0
    loop: start=0, step=1, limit=4
    $region2: #{tpu_custom_call.1} parent=1 // loop_pre_header
      _
    $region3: #{tpu_custom_call.1} parent=1 // loop_header
      %s17 = sphi 0, %s21
      %p18 = scmp.ge.s32.totalorder %s17, 4
      %s24 = sphi 0, %s36
      %s25 = sphi 0, %s32
      %s26 = sphi 0, %s24
      %s27 = sphi 0, %s25
      %s28 = sphi 0, %s26
      %s29 = sphi 0, %s27
      %s41 = sphi 0, %s43
      %s44 = sphi 0, %s41
      %s45 = sphi 0, %s44
      %s61 = sphi 0, %s45
      %s67 = sphi 0, %s69
      %s70 = sphi 0, %s67
      %s71 = sphi 0, %s70
      %s87 = sphi 0, %s71
      %s91 = sphi 0, %s91
      %s93 = sphi 0, %s91
      %s94 = sphi 0, %s93
      %s108 = sphi 0, %s94
      %s112 = sphi 0, %s112
      %s114 = sphi 0, %s112
      %s115 = sphi 0, %s114
      %s129 = sphi 0, %s115
      %s133 = sphi 0, %s133
      %s135 = sphi 0, %s133
      %s136 = sphi 0, %s135
      %s150 = sphi 0, %s136
      %s154 = sphi 0, %s154
      %s156 = sphi 0, %s154
      %s157 = sphi 0, %s156
      %s171 = sphi 0, %s157
      %s175 = sphi 0, %s175
      %s177 = sphi 0, %s175
      %s178 = sphi 0, %s177
      %s192 = sphi 0, %s178
      %s196 = sphi 0, %s196
      %s198 = sphi 0, %s196
      %s199 = sphi 0, %s198
      %s213 = sphi 0, %s199
      %s221 = sphi 0, %s223
      %s224 = sphi 0, %s221
      %s225 = sphi 0, %s224
      %s241 = sphi 0, %s225
    $region4: #{tpu_custom_call.1} parent=1 // loop_header_branch
      %20 = sbr.rel (%p18) target = $region8
    $region5: #{tpu_custom_call.1} parent=1 // loop_body
      %s22 = ssub.s32 %s17, 1
      %s23 = ssub.s32 %s17, 2
      %s30 = sadd.s32 1, %s25
      %p31 = scmp.ge.s32.totalorder %s30, 1
      %s32 = scalar_select %p31, 0, %s30
      %s33 = sadd.s32 1, %s24
      %s34 = scalar_select %p31, %s33, %s24
      %p35 = scmp.ge.s32.totalorder %s34, 2
      %s36 = scalar_select %p35, 0, %s34
      %s37 = ssub.s32 %s24, %s36
      %s38 = ssub.s32 %s25, %s32
      %s39 = sor.u32 %s37, %s38
      %p40 = scmp.eq.s32.totalorder %s39, 0
      %s42 = sadd.s32 %s41, 1
      %s43 = scalar_select %p40, %s41, %s42
      %p46 = pneg %p40
      %p47 = scmp.eq.s32.totalorder %s17, 1
      %p48 = por %p46, %p47
      %p49 = scmp.ne.s32.totalorder %s41, %s44
      %p50 = scmp.eq.s32.totalorder %s17, 0
      %p51 = por %p49, %p50
      %p52 = scmp.ne.s32.totalorder %s41, %s44
      %p53 = scmp.eq.s32.totalorder %s22, 1
      %p54 = por %p52, %p53
      %p55 = scmp.ne.s32.totalorder %s44, %s45
      %p56 = scmp.eq.s32.totalorder %s22, 0
      %p57 = por %p55, %p56
      %p58 = scmp.ne.s32.totalorder %s44, %s45
      %p59 = scmp.eq.s32.totalorder %s23, 1
      %p60 = por %p58, %p59
      %p62 = scmp.ne.s32.totalorder %s45, %s61
      %p63 = scmp.eq.s32.totalorder %s23, 0
      %p64 = por %p62, %p63
      %s65 = ssub.s32 %s24, %s36
      %p66 = scmp.eq.s32.totalorder %s65, 0
      %s68 = sadd.s32 %s67, 1
      %s69 = scalar_select %p66, %s67, %s68
      %p72 = pneg %p66
      %p73 = scmp.eq.s32.totalorder %s17, 1
      %p74 = por %p72, %p73
      %p75 = scmp.ne.s32.totalorder %s67, %s70
      %p76 = scmp.eq.s32.totalorder %s17, 0
      %p77 = por %p75, %p76
      %p78 = scmp.ne.s32.totalorder %s67, %s70
      %p79 = scmp.eq.s32.totalorder %s22, 1
      %p80 = por %p78, %p79
      %p81 = scmp.ne.s32.totalorder %s70, %s71
      %p82 = scmp.eq.s32.totalorder %s22, 0
      %p83 = por %p81, %p82
      %p84 = scmp.ne.s32.totalorder %s70, %s71
      %p85 = scmp.eq.s32.totalorder %s23, 1
      %p86 = por %p84, %p85
      %p88 = scmp.ne.s32.totalorder %s71, %s87
      %p89 = scmp.eq.s32.totalorder %s23, 0
      %p90 = por %p88, %p89
      %s92 = sadd.s32 %s91, 1
      %p95 = scmp.eq.s32.totalorder %s17, 1
      %p96 = scmp.ne.s32.totalorder %s91, %s93
      %p97 = scmp.eq.s32.totalorder %s17, 0
      %p98 = por %p96, %p97
      %p99 = scmp.ne.s32.totalorder %s91, %s93
      %p100 = scmp.eq.s32.totalorder %s22, 1
      %p101 = por %p99, %p100
      %p102 = scmp.ne.s32.totalorder %s93, %s94
      %p103 = scmp.eq.s32.totalorder %s22, 0
      %p104 = por %p102, %p103
      %p105 = scmp.ne.s32.totalorder %s93, %s94
      %p106 = scmp.eq.s32.totalorder %s23, 1
      %p107 = por %p105, %p106
      %p109 = scmp.ne.s32.totalorder %s94, %s108
      %p110 = scmp.eq.s32.totalorder %s23, 0
      %p111 = por %p109, %p110
      %s113 = sadd.s32 %s112, 1
      %p116 = scmp.eq.s32.totalorder %s17, 1
      %p117 = scmp.ne.s32.totalorder %s112, %s114
      %p118 = scmp.eq.s32.totalorder %s17, 0
      %p119 = por %p117, %p118
      %p120 = scmp.ne.s32.totalorder %s112, %s114
      %p121 = scmp.eq.s32.totalorder %s22, 1
      %p122 = por %p120, %p121
      %p123 = scmp.ne.s32.totalorder %s114, %s115
      %p124 = scmp.eq.s32.totalorder %s22, 0
      %p125 = por %p123, %p124
      %p126 = scmp.ne.s32.totalorder %s114, %s115
      %p127 = scmp.eq.s32.totalorder %s23, 1
      %p128 = por %p126, %p127
      %p130 = scmp.ne.s32.totalorder %s115, %s129
      %p131 = scmp.eq.s32.totalorder %s23, 0
      %p132 = por %p130, %p131
      %s134 = sadd.s32 %s133, 1
      %p137 = scmp.eq.s32.totalorder %s17, 1
      %p138 = scmp.ne.s32.totalorder %s133, %s135
      %p139 = scmp.eq.s32.totalorder %s17, 0
      %p140 = por %p138, %p139
      %p141 = scmp.ne.s32.totalorder %s133, %s135
      %p142 = scmp.eq.s32.totalorder %s22, 1
      %p143 = por %p141, %p142
      %p144 = scmp.ne.s32.totalorder %s135, %s136
      %p145 = scmp.eq.s32.totalorder %s22, 0
      %p146 = por %p144, %p145
      %p147 = scmp.ne.s32.totalorder %s135, %s136
      %p148 = scmp.eq.s32.totalorder %s23, 1
      %p149 = por %p147, %p148
      %p151 = scmp.ne.s32.totalorder %s136, %s150
      %p152 = scmp.eq.s32.totalorder %s23, 0
      %p153 = por %p151, %p152
      %s155 = sadd.s32 %s154, 1
      %p158 = scmp.eq.s32.totalorder %s17, 1
      %p159 = scmp.ne.s32.totalorder %s154, %s156
      %p160 = scmp.eq.s32.totalorder %s17, 0
      %p161 = por %p159, %p160
      %p162 = scmp.ne.s32.totalorder %s154, %s156
      %p163 = scmp.eq.s32.totalorder %s22, 1
      %p164 = por %p162, %p163
      %p165 = scmp.ne.s32.totalorder %s156, %s157
      %p166 = scmp.eq.s32.totalorder %s22, 0
      %p167 = por %p165, %p166
      %p168 = scmp.ne.s32.totalorder %s156, %s157
      %p169 = scmp.eq.s32.totalorder %s23, 1
      %p170 = por %p168, %p169
      %p172 = scmp.ne.s32.totalorder %s157, %s171
      %p173 = scmp.eq.s32.totalorder %s23, 0
      %p174 = por %p172, %p173
      %s176 = sadd.s32 %s175, 1
      %p179 = scmp.eq.s32.totalorder %s17, 1
      %p180 = scmp.ne.s32.totalorder %s175, %s177
      %p181 = scmp.eq.s32.totalorder %s17, 0
      %p182 = por %p180, %p181
      %p183 = scmp.ne.s32.totalorder %s175, %s177
      %p184 = scmp.eq.s32.totalorder %s22, 1
      %p185 = por %p183, %p184
      %p186 = scmp.ne.s32.totalorder %s177, %s178
      %p187 = scmp.eq.s32.totalorder %s22, 0
      %p188 = por %p186, %p187
      %p189 = scmp.ne.s32.totalorder %s177, %s178
      %p190 = scmp.eq.s32.totalorder %s23, 1
      %p191 = por %p189, %p190
      %p193 = scmp.ne.s32.totalorder %s178, %s192
      %p194 = scmp.eq.s32.totalorder %s23, 0
      %p195 = por %p193, %p194
      %s197 = sadd.s32 %s196, 1
      %p200 = scmp.eq.s32.totalorder %s17, 1
      %p201 = scmp.ne.s32.totalorder %s196, %s198
      %p202 = scmp.eq.s32.totalorder %s17, 0
      %p203 = por %p201, %p202
      %p204 = scmp.ne.s32.totalorder %s196, %s198
      %p205 = scmp.eq.s32.totalorder %s22, 1
      %p206 = por %p204, %p205
      %p207 = scmp.ne.s32.totalorder %s198, %s199
      %p208 = scmp.eq.s32.totalorder %s22, 0
      %p209 = por %p207, %p208
      %p210 = scmp.ne.s32.totalorder %s198, %s199
      %p211 = scmp.eq.s32.totalorder %s23, 1
      %p212 = por %p210, %p211
      %p214 = scmp.ne.s32.totalorder %s199, %s213
      %p215 = scmp.eq.s32.totalorder %s23, 0
      %p216 = por %p214, %p215
      %s217 = ssub.s32 %s24, %s36
      %s218 = ssub.s32 %s25, %s32
      %s219 = sor.u32 %s217, %s218
      %p220 = scmp.eq.s32.totalorder %s219, 0
      %s222 = sadd.s32 %s221, 1
      %s223 = scalar_select %p220, %s221, %s222
      %p226 = pneg %p220
      %p227 = scmp.eq.s32.totalorder %s17, 1
      %p228 = por %p226, %p227
      %p229 = scmp.ne.s32.totalorder %s221, %s224
      %p230 = scmp.eq.s32.totalorder %s17, 0
      %p231 = por %p229, %p230
      %p232 = scmp.ne.s32.totalorder %s221, %s224
      %p233 = scmp.eq.s32.totalorder %s22, 1
      %p234 = por %p232, %p233
      %p235 = scmp.ne.s32.totalorder %s224, %s225
      %p236 = scmp.eq.s32.totalorder %s22, 0
      %p237 = por %p235, %p236
      %p238 = scmp.ne.s32.totalorder %s224, %s225
      %p239 = scmp.eq.s32.totalorder %s23, 1
      %p240 = por %p238, %p239
      %p242 = scmp.ne.s32.totalorder %s225, %s241
      %p243 = scmp.eq.s32.totalorder %s23, 0
      %p244 = por %p242, %p243
      %p245 = scmp.le.s32.totalorder 1, %s17
      %p246 = scmp.lt.s32.totalorder %s17, 3
      %p247 = pnand %p245, %p246
      %p248 = pneg %p247
      // Predicated region
      $region9: #{tpu_custom_call.1} parent=5 // pred_check
        _
      $region10: #{tpu_custom_call.1} parent=5 // pred_check_branch
        %250 = sbr.rel (%p247) target = $region12
      $region11: #{tpu_custom_call.1} parent=5 // pred_region
        %s251 = ssub.s32 %s17, 1
        // Predicated region
        $region13: #{tpu_custom_call.1} parent=11 // pred_check
          %p252 = pneg %p104
        $region14: #{tpu_custom_call.1} parent=11 // pred_check_branch
          %254 = sbr.rel (%p252) target = $region16
        $region15: #{tpu_custom_call.1} parent=11 // pred_region
          _
        $region16: #{tpu_custom_call.1} parent=11 // pred_fallthru
          _
        // Predicated region
        $region17: #{tpu_custom_call.1} parent=11 // pred_check
          %p255 = pneg %p125
        $region18: #{tpu_custom_call.1} parent=11 // pred_check_branch
          %257 = sbr.rel (%p255) target = $region20
        $region19: #{tpu_custom_call.1} parent=11 // pred_region
          _
        $region20: #{tpu_custom_call.1} parent=11 // pred_fallthru
          _
        // Predicated region
        $region21: #{tpu_custom_call.1} parent=11 // pred_check
          %p258 = pneg %p146
        $region22: #{tpu_custom_call.1} parent=11 // pred_check_branch
          %260 = sbr.rel (%p258) target = $region24
        $region23: #{tpu_custom_call.1} parent=11 // pred_region
          _
        $region24: #{tpu_custom_call.1} parent=11 // pred_fallthru
          _
        // Predicated region
        $region25: #{tpu_custom_call.1} parent=11 // pred_check
          %p261 = pneg %p167
        $region26: #{tpu_custom_call.1} parent=11 // pred_check_branch
          %263 = sbr.rel (%p261) target = $region28
        $region27: #{tpu_custom_call.1} parent=11 // pred_region
          _
        $region28: #{tpu_custom_call.1} parent=11 // pred_fallthru
          _
        // Predicated region
        $region29: #{tpu_custom_call.1} parent=11 // pred_check
          %p264 = pneg %p188
        $region30: #{tpu_custom_call.1} parent=11 // pred_check_branch
          %266 = sbr.rel (%p264) target = $region32
        $region31: #{tpu_custom_call.1} parent=11 // pred_region
          _
        $region32: #{tpu_custom_call.1} parent=11 // pred_fallthru
          _
        // Predicated region
        $region33: #{tpu_custom_call.1} parent=11 // pred_check
          %p267 = pneg %p209
        $region34: #{tpu_custom_call.1} parent=11 // pred_check_branch
          %269 = sbr.rel (%p267) target = $region36
        $region35: #{tpu_custom_call.1} parent=11 // pred_region
          _
        $region36: #{tpu_custom_call.1} parent=11 // pred_fallthru
          _
      $region12: #{tpu_custom_call.1} parent=5 // pred_fallthru
        _
      %p270 = scmp.lt.s32.totalorder %s17, 2
      // Predicated region
      $region37: #{tpu_custom_call.1} parent=5 // pred_check
        %p271 = pneg %p270
      $region38: #{tpu_custom_call.1} parent=5 // pred_check_branch
        %273 = sbr.rel (%p271) target = $region40
      $region39: #{tpu_custom_call.1} parent=5 // pred_region
        // Predicated region
        $region41: #{tpu_custom_call.1} parent=39 // pred_check
          %p274 = pneg %p51
        $region42: #{tpu_custom_call.1} parent=39 // pred_check_branch
          %276 = sbr.rel (%p274) target = $region44
        $region43: #{tpu_custom_call.1} parent=39 // pred_region
          %p277 = scmp.lt.s32.totalorder %s24, 1
          %s278 = scalar_select %p277, %s24, 1
          %p279 = scmp.lt.s32.totalorder %s25, 0
          %s280 = scalar_select %p279, %s25, 0
          %s281 = smul.addr %s278, 8
          %s282 = sadd.s32 %s280, %s281
          %s283 = smul.addr %s282, 8
          %s284 = scalar_lea.vmem %s0, %s283
        $region44: #{tpu_custom_call.1} parent=39 // pred_fallthru
          _
        // Predicated region
        $region45: #{tpu_custom_call.1} parent=39 // pred_check
          %p285 = pneg %p77
        $region46: #{tpu_custom_call.1} parent=39 // pred_check_branch
          %287 = sbr.rel (%p285) target = $region48
        $region47: #{tpu_custom_call.1} parent=39 // pred_region
          %p288 = scmp.lt.s32.totalorder %s24, 1
          %s289 = scalar_select %p288, %s24, 1
          %s290 = smul.addr %s289, 4
          %s291 = smul.addr %s290, 8
          %s292 = scalar_lea.vmem %s1, %s291
        $region48: #{tpu_custom_call.1} parent=39 // pred_fallthru
          _
      $region40: #{tpu_custom_call.1} parent=5 // pred_fallthru
        _
      %p293 = scmp.le.s32.totalorder 1, %s17
      %p294 = scmp.lt.s32.totalorder %s17, 3
      %p295 = pnand %p293, %p294
      %p296 = pneg %p295
      // Predicated region
      $region49: #{tpu_custom_call.1} parent=5 // pred_check
        _
      $region50: #{tpu_custom_call.1} parent=5 // pred_check_branch
        %298 = sbr.rel (%p295) target = $region52
      $region51: #{tpu_custom_call.1} parent=5 // pred_region
        %s299 = ssub.s32 %s17, 1
        %p300 = scmp.lt.s32.totalorder %s26, 1
        %s301 = scalar_select %p300, %s26, 1
        %p302 = scmp.lt.s32.totalorder %s27, 0
        %s303 = scalar_select %p302, %s27, 0
        %s304 = smul.addr %s301, 8
        %s305 = sadd.s32 %s303, %s304
        %s306 = smul.addr %s305, 8
        %s307 = scalar_lea.vmem %s0, %s306
        %p308 = pneg %p57
        %p309 = pneg %p54
        %p310 = scmp.lt.s32.totalorder %s26, 1
        %s311 = scalar_select %p310, %s26, 1
        %s312 = smul.addr %s311, 4
        %s313 = smul.addr %s312, 8
        %s314 = scalar_lea.vmem %s1, %s313
        %p315 = pneg %p83
        %p316 = pneg %p80
        %p317 = pneg %p104
        %p318 = pneg %p101
        %p319 = pneg %p125
        %p320 = pneg %p122
        %p321 = pneg %p146
        %p322 = pneg %p143
        %p323 = pneg %p167
        %p324 = pneg %p164
        %p325 = pneg %p188
        %p326 = pneg %p185
        %p327 = pneg %p209
        %p328 = pneg %p206
        %p329 = pneg %p237
        %p330 = pneg %p234
        %s331 = sand.u32 %s224, 1
        %s332 = scalar_lea.sflag [#allocation3], %s331
        %s333 = sand.u32 %s224, 1
        %s334 = smul.addr %s333, 64
        %s335 = scalar_lea.vmem [#allocation2], %s334
        %p336 = scmp.lt.s32.totalorder %s26, 1
        %s337 = scalar_select %p336, %s26, 1
        %p338 = scmp.lt.s32.totalorder %s27, 0
        %s339 = scalar_select %p338, %s27, 0
        %s340 = smul.addr %s337, 8
        %s341 = sadd.s32 %s339, %s340
        %s342 = smul.addr %s341, 8
        %s343 = scalar_lea.vmem %s0, %s342
        %p344 = scmp.lt.s32.totalorder %s26, 1
        %s345 = scalar_select %p344, %s26, 1
        %s346 = smul.addr %s345, 4
        %s347 = smul.addr %s346, 8
        %s348 = scalar_lea.vmem %s1, %s347
        %v349 = vld [vmem:[%s348] sm:$0xff]
        %v350 = vld [vmem:[%s348 + $0x8] sm:$0xff]
        %v351 = vld [vmem:[%s348 + $0x10] sm:$0xff]
        %v352 = vld [vmem:[%s348 + $0x18] sm:$0xff]
        %vm353 = vcmask 7168
        %v354 = vsel %vm353, %v349, 0.0
        %v355 = vsel %vm353, %v350, 0.0
        %v356 = vadd.f32 %v354, %v355
        %v357 = vsel %vm353, %v351, 0.0
        %v358 = vadd.f32 %v356, %v357
        %v359 = vsel %vm353, %v352, 0.0
        %v360 = vadd.f32 %v358, %v359
        %v361 = vrot.slane %v360, 4
        %v362 = vadd.f32 %v360, %v361
        %v363 = vrot.slane %v362, 2
        %v364 = vadd.f32 %v362, %v363
        %v365 = vrot.slane %v364, 1
        %v366 = vadd.f32 %v364, %v365
        %v367 = vrcp.pop 32.0
        %v368 = vmul.f32 %v366, %v367
        %v369 = vsub.f32 %v349, %v368
        %v370 = vsub.f32 %v350, %v368
        %v371 = vsub.f32 %v351, %v368
        %v372 = vsub.f32 %v352, %v368
        %v373 = vmul.f32 %v369, %v369
        %v374 = vmul.f32 %v370, %v370
        %v375 = vmul.f32 %v371, %v371
        %v376 = vmul.f32 %v372, %v372
        %v377 = vsel %vm353, %v373, 0.0
        %v378 = vsel %vm353, %v374, 0.0
        %v379 = vadd.f32 %v377, %v378
        %v380 = vsel %vm353, %v375, 0.0
        %v381 = vadd.f32 %v379, %v380
        %v382 = vsel %vm353, %v376, 0.0
        %v383 = vadd.f32 %v381, %v382
        %v384 = vrot.slane %v383, 4
        %v385 = vadd.f32 %v383, %v384
        %v386 = vrot.slane %v385, 2
        %v387 = vadd.f32 %v385, %v386
        %v388 = vrot.slane %v387, 1
        %v389 = vadd.f32 %v387, %v388
        %v390 = vmul.f32 %v389, %v367
        %v391 = vadd.f32 %v390, 1e-05
        %v392 = vrsqrt.pop %v391
        %v393 = vmul.f32 %v369, %v392
        %v394 = vmul.f32 %v370, %v392
        %v395 = vmul.f32 %v371, %v392
        %v396 = vmul.f32 %v372, %v392
        %v397 = vld [vmem:[%s2] sm:$0xff]
        %v398 = vld [vmem:[%s2 + $0x8] sm:$0xff]
        %v399 = vld [vmem:[%s2 + $0x10] sm:$0xff]
        %v400 = vld [vmem:[%s2 + $0x18] sm:$0xff]
        %v401 = vmul.f32 %v393, %v397
        %v402 = vmul.f32 %v394, %v398
        %v403 = vmul.f32 %v395, %v399
        %v404 = vmul.f32 %v396, %v400
        %v405 = vld [vmem:[%s3] sm:$0xff]
        %v406 = vld [vmem:[%s3 + $0x8] sm:$0xff]
        %v407 = vld [vmem:[%s3 + $0x10] sm:$0xff]
        %v408 = vld [vmem:[%s3 + $0x18] sm:$0xff]
        %v409 = vadd.f32 %v401, %v405
        %v410 = vadd.f32 %v402, %v406
        %v411 = vadd.f32 %v403, %v407
        %v412 = vadd.f32 %v404, %v408
        %v413 = vld [vmem:[%s4] sm:$0xff]
        %v414 = vld [vmem:[%s4 + $0x8] sm:$0xff]
        %v415 = vld [vmem:[%s4 + $0x10] sm:$0xff]
        %v416 = vld [vmem:[%s4 + $0x18] sm:$0xff]
        %v417 = vld [vmem:[%s4 + $0x20] sm:$0xff]
        %v418 = vld [vmem:[%s4 + $0x28] sm:$0xff]
        %v419 = vld [vmem:[%s4 + $0x30] sm:$0xff]
        %v420 = vld [vmem:[%s4 + $0x38] sm:$0xff]
        %v421 = vld [vmem:[%s5] sm:$0xff]
        %v422 = vld [vmem:[%s5 + $0x8] sm:$0xff]
        %v423 = vld [vmem:[%s5 + $0x10] sm:$0xff]
        %v424 = vld [vmem:[%s5 + $0x18] sm:$0xff]
        %v425 = vld [vmem:[%s5 + $0x20] sm:$0xff]
        %v426 = vld [vmem:[%s5 + $0x28] sm:$0xff]
        %v427 = vld [vmem:[%s5 + $0x30] sm:$0xff]
        %v428 = vld [vmem:[%s5 + $0x38] sm:$0xff]
        %vm429 = vcmask 261120
        %v431 = vsel %vm429, %v413, 0
        %v434 = vsel %vm429, %v414, 0
        %v437 = vsel %vm429, %v415, 0
        %v440 = vsel %vm429, %v416, 0
        %v443 = vsel %vm429, %v417, 0
        %v446 = vsel %vm429, %v418, 0
        %v449 = vsel %vm429, %v419, 0
        %v452 = vsel %vm429, %v420, 0
        %454 = vmatprep.subr.mxu0 0.0
        %455 = vmatpush1.msra.mxu0 %v409
        %456 = vmatprep.subr.mxu0 0.0
        %457 = vmatpush1.msra.mxu0 %v410
        %458 = vmatprep.subr.mxu0 0.0
        %459 = vmatpush1.msra.mxu0 %v411
        %460 = vmatprep.subr.mxu0 0.0
        %461 = vmatpush1.msra.mxu0 %v412
        %462 = vmatprep.subr.mxu0 0.0
        %463 = vmatpush1.msra.mxu0 0.0
        %464 = vmatprep.subr.mxu0 0.0
        %465 = vmatpush1.msra.mxu0 0.0
        %466 = vmatprep.subr.mxu0 0.0
        %467 = vmatpush1.msra.mxu0 0.0
        %468 = vmatprep.subr.mxu0 0.0
        %469 = vmatpush1.msra.mxu0 0.0
        %470 = vmatprep.subr.mxu0 0.0
        %471 = vmatpush1.msra.mxu0 0.0
        %472 = vmatprep.subr.mxu0 0.0
        %473 = vmatpush1.msra.mxu0 0.0
        %474 = vmatprep.subr.mxu0 0.0
        %475 = vmatpush1.msra.mxu0 0.0
        %476 = vmatprep.subr.mxu0 0.0
        %477 = vmatpush1.msra.mxu0 0.0
        %478 = vmatprep.subr.mxu0 0.0
        %479 = vmatpush1.msra.mxu0 0.0
        %480 = vmatprep.subr.mxu0 0.0
        %481 = vmatpush1.msra.mxu0 0.0
        %482 = vmatprep.subr.mxu0 0.0
        %483 = vmatpush1.msra.mxu0 0.0
        %484 = vmatprep.subr.mxu0 0.0
        %485 = vmatpush1.msra.mxu0 0.0
        %486 = vmatprep.subr.mxu0 0.0
        %487 = vmatpush1.msra.mxu0 0.0
        %488 = vmatprep.subr.mxu0 0.0
        %489 = vmatpush1.msra.mxu0 0.0
        %490 = vmatprep.subr.mxu0 0.0
        %491 = vmatpush1.msra.mxu0 0.0
        %492 = vmatprep.subr.mxu0 0.0
        %493 = vmatpush1.msra.mxu0 0.0
        %494 = vmatprep.subr.mxu0 0.0
        %495 = vmatpush1.msra.mxu0 0.0
        %496 = vmatprep.subr.mxu0 0.0
        %497 = vmatpush1.msra.mxu0 0.0
        %498 = vmatprep.subr.mxu0 0.0
        %499 = vmatpush1.msra.mxu0 0.0
        %500 = vmatprep.subr.mxu0 0.0
        %501 = vmatpush1.msra.mxu0 0.0
        %502 = vmatprep.subr.mxu0 0.0
        %503 = vmatpush1.msra.mxu0 0.0
        %504 = vmatprep.subr.mxu0 0.0
        %505 = vmatpush1.msra.mxu0 0.0
        %506 = vmatprep.subr.mxu0 0.0
        %507 = vmatpush1.msra.mxu0 0.0
        %508 = vmatprep.subr.mxu0 0.0
        %509 = vmatpush1.msra.mxu0 0.0
        %510 = vmatprep.subr.mxu0 0.0
        %511 = vmatpush1.msra.mxu0 0.0
        %512 = vmatprep.subr.mxu0 0.0
        %513 = vmatpush1.msra.mxu0 0.0
        %514 = vmatprep.subr.mxu0 0.0
        %515 = vmatpush1.msra.mxu0 0.0
        %516 = vmatprep.subr.mxu0 0.0
        %517 = vmatpush1.msra.mxu0 0.0
        %518 = vmatprep.mubr.f32.mxu0 0.0
        %519 = vmatmul.mubr.f32.gmra.mrb[0].mxu0 %v431
        %v520 = vpop.f32.mrb[0].mxu0
        %v521 = vadd.f32 %v421, %v520
        %v522 = vpop.f32.mrb[0].mxu0
        %523 = vmatprep.mubr.f32.mxu0 0.0
        %524 = vmatmul.mubr.f32.gmra.mrb[0].mxu0 %v434
        %v525 = vpop.f32.mrb[0].mxu0
        %v526 = vadd.f32 %v422, %v525
        %v527 = vpop.f32.mrb[0].mxu0
        %528 = vmatprep.mubr.f32.mxu0 0.0
        %529 = vmatmul.mubr.f32.gmra.mrb[0].mxu0 %v437
        %v530 = vpop.f32.mrb[0].mxu0
        %v531 = vadd.f32 %v423, %v530
        %v532 = vpop.f32.mrb[0].mxu0
        %533 = vmatprep.mubr.f32.mxu0 0.0
        %534 = vmatmul.mubr.f32.gmra.mrb[0].mxu0 %v440
        %v535 = vpop.f32.mrb[0].mxu0
        %v536 = vadd.f32 %v424, %v535
        %v537 = vpop.f32.mrb[0].mxu0
        %538 = vmatprep.mubr.f32.mxu0 0.0
        %539 = vmatmul.mubr.f32.gmra.mrb[0].mxu0 %v443
        %v540 = vpop.f32.mrb[0].mxu0
        %v541 = vadd.f32 %v425, %v540
        %v542 = vpop.f32.mrb[0].mxu0
        %543 = vmatprep.mubr.f32.mxu0 0.0
        %544 = vmatmul.mubr.f32.gmra.mrb[0].mxu0 %v446
        %v545 = vpop.f32.mrb[0].mxu0
        %v546 = vadd.f32 %v426, %v545
        %v547 = vpop.f32.mrb[0].mxu0
        %548 = vmatprep.mubr.f32.mxu0 0.0
        %549 = vmatmul.mubr.f32.gmra.mrb[0].mxu0 %v449
        %v550 = vpop.f32.mrb[0].mxu0
        %v551 = vadd.f32 %v427, %v550
        %v552 = vpop.f32.mrb[0].mxu0
        %553 = vmatprep.mubr.f32.mxu0 0.0
        %554 = vmatmul.mubr.f32.gmra.mrb[0].mxu0 %v452
        %v555 = vpop.f32.mrb[0].mxu0
        %v556 = vadd.f32 %v428, %v555
        %v557 = vpop.f32.mrb[0].mxu0
        %558 = vdwg.mxu0
        %v559 = vld [vmem:[%s6] sm:$0xff]
        %v560 = vld [vmem:[%s6 + $0x8] sm:$0xff]
        %v561 = vld [vmem:[%s6 + $0x10] sm:$0xff]
        %v562 = vld [vmem:[%s6 + $0x18] sm:$0xff]
        %v563 = vld [vmem:[%s6 + $0x20] sm:$0xff]
        %v564 = vld [vmem:[%s6 + $0x28] sm:$0xff]
        %v565 = vld [vmem:[%s6 + $0x30] sm:$0xff]
        %v566 = vld [vmem:[%s6 + $0x38] sm:$0xff]
        %v567 = vld [vmem:[%s7] sm:$0xff]
        %v568 = vld [vmem:[%s7 + $0x8] sm:$0xff]
        %v569 = vld [vmem:[%s7 + $0x10] sm:$0xff]
        %v570 = vld [vmem:[%s7 + $0x18] sm:$0xff]
        %v571 = vld [vmem:[%s7 + $0x20] sm:$0xff]
        %v572 = vld [vmem:[%s7 + $0x28] sm:$0xff]
        %v573 = vld [vmem:[%s7 + $0x30] sm:$0xff]
        %v574 = vld [vmem:[%s7 + $0x38] sm:$0xff]
        %vm575 = vcmask 523264
        %v577 = vsel %vm575, %v559, 0
        %v580 = vsel %vm575, %v560, 0
        %v583 = vsel %vm575, %v561, 0
        %v586 = vsel %vm575, %v562, 0
        %v589 = vsel %vm575, %v563, 0
        %v592 = vsel %vm575, %v564, 0
        %v595 = vsel %vm575, %v565, 0
        %v598 = vsel %vm575, %v566, 0
        %600 = vmatprep.subr.mxu0 0.0
        %601 = vmatpush1.msra.mxu0 %v521
        %602 = vmatprep.subr.mxu0 0.0
        %603 = vmatpush1.msra.mxu0 %v526
        %604 = vmatprep.subr.mxu0 0.0
        %605 = vmatpush1.msra.mxu0 %v531
        %606 = vmatprep.subr.mxu0 0.0
        %607 = vmatpush1.msra.mxu0 %v536
        %608 = vmatprep.subr.mxu0 0.0
        %609 = vmatpush1.msra.mxu0 %v541
        %610 = vmatprep.subr.mxu0 0.0
        %611 = vmatpush1.msra.mxu0 %v546
        %612 = vmatprep.subr.mxu0 0.0
        %613 = vmatpush1.msra.mxu0 %v551
        %614 = vmatprep.subr.mxu0 0.0
        %615 = vmatpush1.msra.mxu0 %v556
        %616 = vmatprep.subr.mxu0 0.0
        %617 = vmatpush1.msra.mxu0 0.0
        %618 = vmatprep.subr.mxu0 0.0
        %619 = vmatpush1.msra.mxu0 0.0
        %620 = vmatprep.subr.mxu0 0.0
        %621 = vmatpush1.msra.mxu0 0.0
        %622 = vmatprep.subr.mxu0 0.0
        %623 = vmatpush1.msra.mxu0 0.0
        %624 = vmatprep.subr.mxu0 0.0
        %625 = vmatpush1.msra.mxu0 0.0
        %626 = vmatprep.subr.mxu0 0.0
        %627 = vmatpush1.msra.mxu0 0.0
        %628 = vmatprep.subr.mxu0 0.0
        %629 = vmatpush1.msra.mxu0 0.0
        %630 = vmatprep.subr.mxu0 0.0
        %631 = vmatpush1.msra.mxu0 0.0
        %632 = vmatprep.subr.mxu0 0.0
        %633 = vmatpush1.msra.mxu0 0.0
        %634 = vmatprep.subr.mxu0 0.0
        %635 = vmatpush1.msra.mxu0 0.0
        %636 = vmatprep.subr.mxu0 0.0
        %637 = vmatpush1.msra.mxu0 0.0
        %638 = vmatprep.subr.mxu0 0.0
        %639 = vmatpush1.msra.mxu0 0.0
        %640 = vmatprep.subr.mxu0 0.0
        %641 = vmatpush1.msra.mxu0 0.0
        %642 = vmatprep.subr.mxu0 0.0
        %643 = vmatpush1.msra.mxu0 0.0
        %644 = vmatprep.subr.mxu0 0.0
        %645 = vmatpush1.msra.mxu0 0.0
        %646 = vmatprep.subr.mxu0 0.0
        %647 = vmatpush1.msra.mxu0 0.0
        %648 = vmatprep.subr.mxu0 0.0
        %649 = vmatpush1.msra.mxu0 0.0
        %650 = vmatprep.subr.mxu0 0.0
        %651 = vmatpush1.msra.mxu0 0.0
        %652 = vmatprep.subr.mxu0 0.0
        %653 = vmatpush1.msra.mxu0 0.0
        %654 = vmatprep.subr.mxu0 0.0
        %655 = vmatpush1.msra.mxu0 0.0
        %656 = vmatprep.subr.mxu0 0.0
        %657 = vmatpush1.msra.mxu0 0.0
        %658 = vmatprep.subr.mxu0 0.0
        %659 = vmatpush1.msra.mxu0 0.0
        %660 = vmatprep.subr.mxu0 0.0
        %661 = vmatpush1.msra.mxu0 0.0
        %662 = vmatprep.subr.mxu0 0.0
        %663 = vmatpush1.msra.mxu0 0.0
        %664 = vmatprep.mubr.f32.mxu0 0.0
        %665 = vmatmul.mubr.f32.gmra.mrb[0].mxu0 %v577
        %v666 = vpop.f32.mrb[0].mxu0
        %v667 = vadd.f32 %v567, %v666
        %v668 = vpop.f32.mrb[0].mxu0
        %669 = vmatprep.mubr.f32.mxu0 0.0
        %670 = vmatmul.mubr.f32.gmra.mrb[0].mxu0 %v580
        %v671 = vpop.f32.mrb[0].mxu0
        %v672 = vadd.f32 %v568, %v671
        %v673 = vpop.f32.mrb[0].mxu0
        %674 = vmatprep.mubr.f32.mxu0 0.0
        %675 = vmatmul.mubr.f32.gmra.mrb[0].mxu0 %v583
        %v676 = vpop.f32.mrb[0].mxu0
        %v677 = vadd.f32 %v569, %v676
        %v678 = vpop.f32.mrb[0].mxu0
        %679 = vmatprep.mubr.f32.mxu0 0.0
        %680 = vmatmul.mubr.f32.gmra.mrb[0].mxu0 %v586
        %v681 = vpop.f32.mrb[0].mxu0
        %v682 = vadd.f32 %v570, %v681
        %v683 = vpop.f32.mrb[0].mxu0
        %684 = vmatprep.mubr.f32.mxu0 0.0
        %685 = vmatmul.mubr.f32.gmra.mrb[0].mxu0 %v589
        %v686 = vpop.f32.mrb[0].mxu0
        %v687 = vadd.f32 %v571, %v686
        %v688 = vpop.f32.mrb[0].mxu0
        %689 = vmatprep.mubr.f32.mxu0 0.0
        %690 = vmatmul.mubr.f32.gmra.mrb[0].mxu0 %v592
        %v691 = vpop.f32.mrb[0].mxu0
        %v692 = vadd.f32 %v572, %v691
        %v693 = vpop.f32.mrb[0].mxu0
        %694 = vmatprep.mubr.f32.mxu0 0.0
        %695 = vmatmul.mubr.f32.gmra.mrb[0].mxu0 %v595
        %v696 = vpop.f32.mrb[0].mxu0
        %v697 = vadd.f32 %v573, %v696
        %v698 = vpop.f32.mrb[0].mxu0
        %699 = vmatprep.mubr.f32.mxu0 0.0
        %700 = vmatmul.mubr.f32.gmra.mrb[0].mxu0 %v598
        %v701 = vpop.f32.mrb[0].mxu0
        %v702 = vadd.f32 %v574, %v701
        %v703 = vpop.f32.mrb[0].mxu0
        %704 = vdwg.mxu0
        %v705 = vld [vmem:[%s343] sm:$0xff]
        %v706 = vld [vmem:[%s343 + $0x8] sm:$0xff]
        %v707 = vld [vmem:[%s343 + $0x10] sm:$0xff]
        %v708 = vld [vmem:[%s343 + $0x18] sm:$0xff]
        %v709 = vld [vmem:[%s343 + $0x20] sm:$0xff]
        %v710 = vld [vmem:[%s343 + $0x28] sm:$0xff]
        %v711 = vld [vmem:[%s343 + $0x30] sm:$0xff]
        %v712 = vld [vmem:[%s343 + $0x38] sm:$0xff]
        %714 = vset.pattern.permute.xlu0 0
        %715 = vperm.xlu0 %714, %v667
        %v716 = vpop.permute.xlu0 %715
        %719 = vset.pattern.permute.xlu0 0
        %720 = vperm.xlu0 %719, %v672
        %v721 = vpop.permute.xlu0 %720
        %724 = vset.pattern.permute.xlu0 0
        %725 = vperm.xlu0 %724, %v677
        %v726 = vpop.permute.xlu0 %725
        %729 = vset.pattern.permute.xlu0 0
        %730 = vperm.xlu0 %729, %v682
        %v731 = vpop.permute.xlu0 %730
        %734 = vset.pattern.permute.xlu0 0
        %735 = vperm.xlu0 %734, %v687
        %v736 = vpop.permute.xlu0 %735
        %739 = vset.pattern.permute.xlu0 0
        %740 = vperm.xlu0 %739, %v692
        %v741 = vpop.permute.xlu0 %740
        %744 = vset.pattern.permute.xlu0 0
        %745 = vperm.xlu0 %744, %v697
        %v746 = vpop.permute.xlu0 %745
        %749 = vset.pattern.permute.xlu0 0
        %750 = vperm.xlu0 %749, %v702
        %v751 = vpop.permute.xlu0 %750
        %v753 = vadd.f32 %v705, %v716
        %v754 = vadd.f32 %v706, %v721
        %v755 = vadd.f32 %v707, %v726
        %v756 = vadd.f32 %v708, %v731
        %v757 = vadd.f32 %v709, %v736
        %v758 = vadd.f32 %v710, %v741
        %v759 = vadd.f32 %v711, %v746
        %v760 = vadd.f32 %v712, %v751
        %761 = vst.msk [vmem:[%s335] sm:$0xff] %vm575, %v753
        %762 = vst.msk [vmem:[%s335 + $0x8] sm:$0xff] %vm575, %v754
        %763 = vst.msk [vmem:[%s335 + $0x10] sm:$0xff] %vm575, %v755
        %764 = vst.msk [vmem:[%s335 + $0x18] sm:$0xff] %vm575, %v756
        %765 = vst.msk [vmem:[%s335 + $0x20] sm:$0xff] %vm575, %v757
        %766 = vst.msk [vmem:[%s335 + $0x28] sm:$0xff] %vm575, %v758
        %767 = vst.msk [vmem:[%s335 + $0x30] sm:$0xff] %vm575, %v759
        %768 = vst.msk [vmem:[%s335 + $0x38] sm:$0xff] %vm575, %v760
        %s769 = sand.u32 %s224, 1
        %s770 = scalar_lea.sflag [#allocation3], %s769
        %s771 = sand.u32 %s224, 1
        %s772 = smul.addr %s771, 64
        %s773 = scalar_lea.vmem [#allocation2], %s772
        // Predicated region
        $region53: #{tpu_custom_call.1} parent=51 // pred_check
          %p774 = pneg %p234
        $region54: #{tpu_custom_call.1} parent=51 // pred_check_branch
          %776 = sbr.rel (%p774) target = $region56
        $region55: #{tpu_custom_call.1} parent=51 // pred_region
          %s778 = ssub.s32 1024, 1024
          %779 = vsyncadd %s770, %s778
          %s780 = smul.addr %s26, 8
          %s781 = sadd.s32 %s27, %s780
          %s782 = smul.addr %s781, 128
          %s783 = scalar_lea.hbm %s8, %s782
          %s784 = sshll.u32 %s773, 4
          %s785 = int_to_ptr.vmem [resolvable:$true] %s784
          %790 = dma.vmem_to_hbm [thread:$0]  %s785, 1024, %s783, %s770, 128, 128, 8
        $region56: #{tpu_custom_call.1} parent=51 // pred_fallthru
          _
      $region52: #{tpu_custom_call.1} parent=5 // pred_fallthru
        _
      %p791 = scmp.le.s32.totalorder 2, %s17
      // Predicated region
      $region57: #{tpu_custom_call.1} parent=5 // pred_check
        %p792 = pneg %p791
      $region58: #{tpu_custom_call.1} parent=5 // pred_check_branch
        %794 = sbr.rel (%p792) target = $region60
      $region59: #{tpu_custom_call.1} parent=5 // pred_region
        %s795 = ssub.s32 %s17, 2
        // Predicated region
        $region61: #{tpu_custom_call.1} parent=59 // pred_check
          %p796 = pneg %p240
        $region62: #{tpu_custom_call.1} parent=59 // pred_check_branch
          %798 = sbr.rel (%p796) target = $region64
        $region63: #{tpu_custom_call.1} parent=59 // pred_region
          %s799 = sand.u32 %s225, 1
          %s800 = scalar_lea.sflag [#allocation3], %s799
          %s801 = sand.u32 %s225, 1
          %s802 = smul.addr %s801, 64
          %s803 = scalar_lea.vmem [#allocation2], %s802
          %804 = dma.done %s800, 1024
        $region64: #{tpu_custom_call.1} parent=59 // pred_fallthru
          _
      $region60: #{tpu_custom_call.1} parent=5 // pred_fallthru
        _
    $region6: #{tpu_custom_call.1} parent=1 // loop_footer
      %s21 = sadd.s32 1, %s17
    $region7: #{tpu_custom_call.1} parent=1 // loop_footer_branch
      %16 = sbr.rel target = $region3
    $region8: #{tpu_custom_call.1} parent=1 // loop_exit
      _
    %805 = vsyncpa [#allocation3], 1
    %s806 = scalar_lea.sflag [#allocation3], 1
    %807 = vsyncpa %s806, 1

</llo_original>
